<compile_context>
chip_gen: v6e
topology: v6e:2x2x1
jax: 0.10.0
libtpu: 0.0.40
codegen_flags: <defaults>
</compile_context>

<pallas_src>
import math
import functools

import jax
import jax.numpy as jnp
from jax import lax
from jax.experimental import pallas as pl
from jax.experimental.pallas import tpu as pltpu


def _pick_tile(n, candidates=(512, 256, 128)):
    for c in candidates:
        if n % c == 0:
            return c
    return n


# ---------------------------------------------------------------------------
# Kernel 1: fused K/V/Q projections.
#   grid (B, S//ts); k/v/q are separate inputs (no host-side stack); the three
#   (D,D) weights + (3,D) bias sit in VMEM with constant index maps.  The
#   query scale is applied to the f32 accumulator before the dtype cast.
# ---------------------------------------------------------------------------
def _proj_kernel(k_ref, v_ref, q_ref, wk_ref, wv_ref, wq_ref, b_ref,
                 ko_ref, vo_ref, qo_ref, *, scale):
    yk = jnp.dot(k_ref[0], wk_ref[...],
                 preferred_element_type=jnp.float32) + b_ref[0:1, :]
    yv = jnp.dot(v_ref[0], wv_ref[...],
                 preferred_element_type=jnp.float32) + b_ref[1:2, :]
    yq = (jnp.dot(q_ref[0], wq_ref[...],
                  preferred_element_type=jnp.float32) + b_ref[2:3, :]) * scale
    ko_ref[0] = yk.astype(ko_ref.dtype)
    vo_ref[0] = yv.astype(vo_ref.dtype)
    qo_ref[0] = yq.astype(qo_ref.dtype)


def _project_kvq(k, v, q, wk, bk, wv, bv, wq, bq, *, dim_per_head,
                 compute_dtype):
    B, S, D = q.shape
    scale = 1.0 / math.sqrt(dim_per_head)

    kc = k.astype(compute_dtype)
    vc = v.astype(compute_dtype)
    qc = q.astype(compute_dtype)
    wkc = wk.astype(compute_dtype)
    wvc = wv.astype(compute_dtype)
    wqc = wq.astype(compute_dtype)
    bias = jnp.concatenate([bk, bv, bq], axis=0).astype(jnp.float32)  # (3, D)

    ts = _pick_tile(S, (512, 256, 128))
    grid = (B, S // ts)

    kernel = functools.partial(_proj_kernel, scale=scale)
    out_sds = jax.ShapeDtypeStruct((B, S, D), compute_dtype)
    x_spec = pl.BlockSpec((1, ts, D), lambda b, si: (b, si, 0))
    w_spec = pl.BlockSpec((D, D), lambda b, si: (0, 0))        # resident

    # TODO(synk): for very large D (e.g. 2048+) on v7x, the three resident
    # (D,D) weights should be tiled along D_out to stay inside 64 MiB VMEM.
    return pl.pallas_call(
        kernel,
        out_shape=(out_sds, out_sds, out_sds),
        grid_spec=pltpu.PrefetchScalarGridSpec(
            num_scalar_prefetch=0,
            grid=grid,
            in_specs=[
                x_spec, x_spec, x_spec,                    # key, value, query
                w_spec, w_spec, w_spec,                    # Wk, Wv, Wq
                pl.BlockSpec((3, D), lambda b, si: (0, 0)),  # biases
            ],
            out_specs=(x_spec, x_spec, x_spec),
        ),
        compiler_params=pltpu.CompilerParams(
            dimension_semantics=("parallel", "parallel"),
            vmem_limit_bytes=48 * 1024 * 1024,
        ),
    )(kc, vc, qc, wkc, wvc, wqc, bias)


# ---------------------------------------------------------------------------
# Kernel 2: flash attention (heads looped in-kernel) + fused, deferred output
# projection.  grid (B, S//tq, S//tk); ki is the only reduction axis.
# ---------------------------------------------------------------------------
def _attn_kernel(q_ref, k_ref, v_ref, wo_ref, bo_ref, out_ref,
                 m_s, l_s, ctx_s, *, head_count, dim_per_head, compute_dtype):
    ki = pl.program_id(2)
    n_k = pl.num_programs(2)

    @pl.when(ki == 0)
    def _():
        m_s[...] = jnp.full_like(m_s, -jnp.inf)
        l_s[...] = jnp.zeros_like(l_s)
        ctx_s[...] = jnp.zeros_like(ctx_s)

    # Static loop over heads: all slices below have static offsets, and each
    # head's state lives in VMEM scratch (no long live ranges across the
    # unrolled loop).
    for hh in range(head_count):
        q = q_ref[0, hh]                    # (tq, dph), pre-scaled, compute_dtype
        k = k_ref[0, hh]                    # (tk, dph)
        v = v_ref[0, hh]                    # (tk, dph)

        # scores = q @ k^T without materializing the transpose (MXU consumes
        # the contracted RHS directly); f32 accumulation.
        s = lax.dot_general(q, k, (((1,), (1,)), ((), ())),
                            preferred_element_type=jnp.float32)   # (tq, tk)

        col = slice(hh, hh + 1)
        lane = slice(hh * dim_per_head, (hh + 1) * dim_per_head)

        m_prev = m_s[:, col]
        m_new = jnp.maximum(m_prev, jnp.max(s, axis=-1, keepdims=True))
        alpha = jnp.exp(m_prev - m_new)
        # TODO(synk): on v6e/v7x a bf16 exp here would double EUP throughput;
        # kept f32 for accuracy (and v5e has no bf16 EUP).
        p = jnp.exp(s - m_new)                                    # f32
        l_s[:, col] = alpha * l_s[:, col] + jnp.sum(p, axis=-1, keepdims=True)
        ctx_s[:, lane] = alpha * ctx_s[:, lane] + jnp.dot(
            p.astype(compute_dtype), v, preferred_element_type=jnp.float32)
        m_s[:, col] = m_new

    @pl.when(ki == n_k - 1)
    def _():
        # Normalize each head in place (exact reciprocal: EUP-cheap and the
        # kernel is no longer overhead-bound), then ONE (tq,D)x(D,D) output
        # projection against the VMEM-resident Wo.
        for hh in range(head_count):
            lane = slice(hh * dim_per_head, (hh + 1) * dim_per_head)
            inv_l = pl.reciprocal(l_s[:, hh:hh + 1], approx=False)
            ctx_s[:, lane] = ctx_s[:, lane] * inv_l
        out = jnp.dot(ctx_s[...].astype(compute_dtype), wo_ref[...],
                      preferred_element_type=jnp.float32) + bo_ref[...]
        out_ref[0] = out.astype(out_ref.dtype)


def multi_headed_attention(key, value, query, params, head_count,
                           compute_dtype=jnp.bfloat16,
                           seq_tile=None, kv_tile=None):
    B, S, D = query.shape
    assert key.shape == value.shape == query.shape, \
        "equal key/query lengths only"   # TODO(synk): cross-attention lengths
    assert D % head_count == 0
    dph = D // head_count
    wk, bk, wv, bv, wq, bq, wo, bo = params

    # --- Kernel 1: fused projections (resident weights, exact q scaling) ----
    kp, vp, qp = _project_kvq(key, value, query, wk, bk, wv, bv, wq, bq,
                              dim_per_head=dph, compute_dtype=compute_dtype)

    # Layout plumbing (XLA, on compute_dtype data): head-major (B, H, S, dph)
    # so the attention blocks keep dph as a full, dense trailing dim.
    def to_heads(x):
        return x.reshape(B, S, head_count, dph).transpose(0, 2, 1, 3)
    Kh, Vh, Qh = to_heads(kp), to_heads(vp), to_heads(qp)

    wo_c = wo.astype(compute_dtype)               # (D, D), resident in VMEM
    bo_f32 = bo.astype(jnp.float32).reshape(1, D)

    # Tile selection: large TQ (K/V re-read factor = S/TQ), large-ish TK so
    # each grid step carries real MXU work.
    if seq_tile is not None:
        assert S % seq_tile == 0
        tq = seq_tile
    else:
        tq = _pick_tile(S, (512, 256, 128))
        # v7x megacore: keep >=2 parallel blocks so both TensorCores get work.
        if B * (S // tq) < 2:
            for c in (256, 128):
                if tq > c and S % c == 0:
                    tq = c
                    break
    if kv_tile is not None:
        assert S % kv_tile == 0
        tk = kv_tile
    else:
        tk = _pick_tile(S, (512, 256, 128))

    grid = (B, S // tq, S // tk)

    kernel = functools.partial(_attn_kernel, head_count=head_count,
                               dim_per_head=dph, compute_dtype=compute_dtype)

    return pl.pallas_call(
        kernel,
        out_shape=jax.ShapeDtypeStruct((B, S, D), query.dtype),
        grid_spec=pltpu.PrefetchScalarGridSpec(
            num_scalar_prefetch=0,
            grid=grid,
            in_specs=[
                pl.BlockSpec((1, head_count, tq, dph),
                             lambda b, qi, ki: (b, 0, qi, 0)),   # Q
                pl.BlockSpec((1, head_count, tk, dph),
                             lambda b, qi, ki: (b, 0, ki, 0)),   # K
                pl.BlockSpec((1, head_count, tk, dph),
                             lambda b, qi, ki: (b, 0, ki, 0)),   # V
                pl.BlockSpec((D, D), lambda b, qi, ki: (0, 0)),  # Wo (resident)
                pl.BlockSpec((1, D), lambda b, qi, ki: (0, 0)),  # bo
            ],
            out_specs=pl.BlockSpec((1, tq, D), lambda b, qi, ki: (b, qi, 0)),
            scratch_shapes=[
                pltpu.VMEM((tq, head_count), jnp.float32),  # running max (per head)
                pltpu.VMEM((tq, head_count), jnp.float32),  # running denom
                pltpu.VMEM((tq, D), jnp.float32),           # all-head context
            ],
        ),
        compiler_params=pltpu.CompilerParams(
            dimension_semantics=("parallel", "parallel", "arbitrary"),
            vmem_limit_bytes=48 * 1024 * 1024,
        ),
    )(Qh, Kh, Vh, wo_c, bo_f32)


# ---------------------------------------------------------------------------
# Pure-JAX reference mirroring the PyTorch forward (eval, no mask/cache).
# ---------------------------------------------------------------------------
def reference_mha(key, value, query, params, head_count):
    B, S, D = query.shape
    dph = D // head_count
    wk, bk, wv, bv, wq, bq, wo, bo = params

    K = key @ wk + bk
    V = value @ wv + bv
    Q = query @ wq + bq

    def shape(x):
        return x.reshape(B, -1, head_count, dph).transpose(0, 2, 1, 3)

    Kh, Vh, Qh = shape(K), shape(V), shape(Q)
    Qh = Qh / math.sqrt(dph)
    scores = jnp.einsum('bhqd,bhkd->bhqk', Qh, Kh)
    attn = jax.nn.softmax(scores, axis=-1)
    ctx = jnp.einsum('bhqk,bhkd->bhqd', attn, Vh)
    ctx = ctx.transpose(0, 2, 1, 3).reshape(B, S, D)
    return ctx @ wo + bo


def init_params(key, model_dim, dtype=jnp.float32):
    # Deterministic init matching nn.Linear's U(-1/sqrt(fan_in), 1/sqrt(fan_in)).
    bound = 1.0 / math.sqrt(model_dim)
    keys = jax.random.split(key, 8)
    def w(k): return jax.random.uniform(k, (model_dim, model_dim), dtype, -bound, bound)
    def b(k): return jax.random.uniform(k, (1, model_dim), dtype, -bound, bound)
    return (w(keys[0]), b(keys[1]),   # keys
            w(keys[2]), b(keys[3]),   # values
            w(keys[4]), b(keys[5]),   # query
            w(keys[6]), b(keys[7]))   # final


if __name__ == "__main__":
    # Test 1: default bf16 MXU path (f32 softmax + f32 accumulators inside).
    B, S, D, H = 2, 8, 32, 4
    root = jax.random.PRNGKey(0)
    k_in, k_k, k_v, k_q = jax.random.split(root, 4)

    params = init_params(k_in, D)
    key = jax.random.normal(k_k, (B, S, D), jnp.float32)
    value = jax.random.normal(k_v, (B, S, D), jnp.float32)
    query = jax.random.normal(k_q, (B, S, D), jnp.float32)

    ref = reference_mha(key, value, query, params, H)

    out_bf16 = multi_headed_attention(key, value, query, params, H)
    out_bf16 = jax.block_until_ready(out_bf16)
    assert out_bf16.shape == (B, S, D)
    assert jnp.allclose(out_bf16, ref, atol=5e-2, rtol=5e-2), "bf16 kernel mismatch"

    # Test 2: f32 compute path with tight tolerance (exact reciprocal).
    out_f32 = multi_headed_attention(key, value, query, params, H,
                                     compute_dtype=jnp.float32)
    out_f32 = jax.block_until_ready(out_f32)
    assert jnp.allclose(out_f32, ref, atol=1e-4, rtol=1e-4), "f32 kernel mismatch"

    # Test 3: multiple query/KV tiles exercise the online-softmax accumulators.
    B2, S2, D2, H2 = 1, 16, 32, 4
    kk2, kv2, kq2 = jax.random.split(jax.random.PRNGKey(1), 3)
    key2 = jax.random.normal(kk2, (B2, S2, D2), jnp.float32)
    value2 = jax.random.normal(kv2, (B2, S2, D2), jnp.float32)
    query2 = jax.random.normal(kq2, (B2, S2, D2), jnp.float32)
    ref2 = reference_mha(key2, value2, query2, params, H2)
    out2 = multi_headed_attention(key2, value2, query2, params, H2,
                                  compute_dtype=jnp.float32,
                                  seq_tile=8, kv_tile=8)
    out2 = jax.block_until_ready(out2)
    assert jnp.allclose(out2, ref2, atol=1e-4, rtol=1e-4), "tiled kernel mismatch"

    print("KERNEL_OK")
</pallas_src>

<mosaic_0001>
module attributes {stable_mosaic.version = 11 : i64} {
  func.func @_proj_kernel(%arg0: i32, %arg1: i32, %arg2: memref<1x8x32xbf16, #tpu.memory_space<vmem>>, %arg3: memref<1x8x32xbf16, #tpu.memory_space<vmem>>, %arg4: memref<1x8x32xbf16, #tpu.memory_space<vmem>>, %arg5: memref<32x32xbf16, #tpu.memory_space<vmem>>, %arg6: memref<32x32xbf16, #tpu.memory_space<vmem>>, %arg7: memref<32x32xbf16, #tpu.memory_space<vmem>>, %arg8: memref<3x32xf32, #tpu.memory_space<vmem>>, %arg9: memref<1x8x32xbf16, #tpu.memory_space<vmem>>, %arg10: memref<1x8x32xbf16, #tpu.memory_space<vmem>>, %arg11: memref<1x8x32xbf16, #tpu.memory_space<vmem>>) attributes {dimension_semantics = [#tpu.dimension_semantics<parallel>, #tpu.dimension_semantics<parallel>], iteration_bounds = array<i64: 2, 1>, scalar_prefetch = 0 : i64, scratch_operands = 0 : i64, tpu.core_type = #tpu.core_type<tc>, window_params = [{transform_indices = @transform_0, window_bounds = array<i64: 1, 8, 32>}, {transform_indices = @transform_1, window_bounds = array<i64: 1, 8, 32>}, {transform_indices = @transform_2, window_bounds = array<i64: 1, 8, 32>}, {pipeline_mode = #tpu.pipeline_mode<synchronous>, transform_indices = @transform_3, window_bounds = array<i64: 32, 32>}, {pipeline_mode = #tpu.pipeline_mode<synchronous>, transform_indices = @transform_4, window_bounds = array<i64: 32, 32>}, {pipeline_mode = #tpu.pipeline_mode<synchronous>, transform_indices = @transform_5, window_bounds = array<i64: 32, 32>}, {pipeline_mode = #tpu.pipeline_mode<synchronous>, transform_indices = @transform_6, window_bounds = array<i64: 3, 32>}, {transform_indices = @transform_7, window_bounds = array<i64: 1, 8, 32>}, {transform_indices = @transform_8, window_bounds = array<i64: 1, 8, 32>}, {transform_indices = @transform_9, window_bounds = array<i64: 1, 8, 32>}]} {
    %c0 = arith.constant 0 : index
    %c0_0 = arith.constant 0 : index
    %c0_1 = arith.constant 0 : index
    %0 = vector.load %arg2[%c0, %c0_0, %c0_1] : memref<1x8x32xbf16, #tpu.memory_space<vmem>>, vector<1x8x32xbf16>
    %1 = vector.shape_cast %0 : vector<1x8x32xbf16> to vector<8x32xbf16>
    %c0_2 = arith.constant 0 : index
    %c0_3 = arith.constant 0 : index
    %2 = vector.load %arg5[%c0_2, %c0_3] : memref<32x32xbf16, #tpu.memory_space<vmem>>, vector<32x32xbf16>
    %cst = arith.constant dense<0.000000e+00> : vector<8x32xf32>
    %3 = tpu.matmul %1, %2, %cst {dimension_numbers = #tpu.dot_dimension_numbers<[1], [0], [0], [1], [0, 0, 1, 1], [], []>} : vector<8x32xbf16>, vector<32x32xbf16>, vector<8x32xf32> -> vector<8x32xf32>
    %c0_4 = arith.constant 0 : index
    %c0_5 = arith.constant 0 : index
    %4 = vector.load %arg8[%c0_4, %c0_5] : memref<3x32xf32, #tpu.memory_space<vmem>>, vector<1x32xf32>
    %5 = vector.broadcast %4 : vector<1x32xf32> to vector<8x32xf32>
    %6 = arith.addf %3, %5 : vector<8x32xf32>
    %c0_6 = arith.constant 0 : index
    %c0_7 = arith.constant 0 : index
    %c0_8 = arith.constant 0 : index
    %7 = vector.load %arg3[%c0_6, %c0_7, %c0_8] : memref<1x8x32xbf16, #tpu.memory_space<vmem>>, vector<1x8x32xbf16>
    %8 = vector.shape_cast %7 : vector<1x8x32xbf16> to vector<8x32xbf16>
    %c0_9 = arith.constant 0 : index
    %c0_10 = arith.constant 0 : index
    %9 = vector.load %arg6[%c0_9, %c0_10] : memref<32x32xbf16, #tpu.memory_space<vmem>>, vector<32x32xbf16>
    %cst_11 = arith.constant dense<0.000000e+00> : vector<8x32xf32>
    %10 = tpu.matmul %8, %9, %cst_11 {dimension_numbers = #tpu.dot_dimension_numbers<[1], [0], [0], [1], [0, 0, 1, 1], [], []>} : vector<8x32xbf16>, vector<32x32xbf16>, vector<8x32xf32> -> vector<8x32xf32>
    %c1 = arith.constant 1 : index
    %c0_12 = arith.constant 0 : index
    %11 = vector.load %arg8[%c1, %c0_12] : memref<3x32xf32, #tpu.memory_space<vmem>>, vector<1x32xf32>
    %12 = vector.broadcast %11 : vector<1x32xf32> to vector<8x32xf32>
    %13 = arith.addf %10, %12 : vector<8x32xf32>
    %c0_13 = arith.constant 0 : index
    %c0_14 = arith.constant 0 : index
    %c0_15 = arith.constant 0 : index
    %14 = vector.load %arg4[%c0_13, %c0_14, %c0_15] : memref<1x8x32xbf16, #tpu.memory_space<vmem>>, vector<1x8x32xbf16>
    %15 = vector.shape_cast %14 : vector<1x8x32xbf16> to vector<8x32xbf16>
    %c0_16 = arith.constant 0 : index
    %c0_17 = arith.constant 0 : index
    %16 = vector.load %arg7[%c0_16, %c0_17] : memref<32x32xbf16, #tpu.memory_space<vmem>>, vector<32x32xbf16>
    %cst_18 = arith.constant dense<0.000000e+00> : vector<8x32xf32>
    %17 = tpu.matmul %15, %16, %cst_18 {dimension_numbers = #tpu.dot_dimension_numbers<[1], [0], [0], [1], [0, 0, 1, 1], [], []>} : vector<8x32xbf16>, vector<32x32xbf16>, vector<8x32xf32> -> vector<8x32xf32>
    %c2 = arith.constant 2 : index
    %c0_19 = arith.constant 0 : index
    %18 = vector.load %arg8[%c2, %c0_19] : memref<3x32xf32, #tpu.memory_space<vmem>>, vector<1x32xf32>
    %19 = vector.broadcast %18 : vector<1x32xf32> to vector<8x32xf32>
    %20 = arith.addf %17, %19 : vector<8x32xf32>
    %cst_20 = arith.constant 0.353553385 : f32
    %21 = vector.broadcast %cst_20 : f32 to vector<8x32xf32>
    %22 = arith.mulf %20, %21 : vector<8x32xf32>
    %23 = arith.truncf %6 : vector<8x32xf32> to vector<8x32xbf16>
    %c0_21 = arith.constant 0 : index
    %c0_22 = arith.constant 0 : index
    %c0_23 = arith.constant 0 : index
    %24 = vector.load %arg9[%c0_21, %c0_22, %c0_23] : memref<1x8x32xbf16, #tpu.memory_space<vmem>>, vector<1x8x32xbf16>
    %25 = vector.shape_cast %24 : vector<1x8x32xbf16> to vector<8x32xbf16>
    %26 = vector.shape_cast %23 : vector<8x32xbf16> to vector<1x8x32xbf16>
    tpu.vector_store %arg9[%c0_21, %c0_22, %c0_23], %26 {strides = array<i32>} : memref<1x8x32xbf16, #tpu.memory_space<vmem>>, vector<1x8x32xbf16>,
    %27 = arith.truncf %13 : vector<8x32xf32> to vector<8x32xbf16>
    %c0_24 = arith.constant 0 : index
    %c0_25 = arith.constant 0 : index
    %c0_26 = arith.constant 0 : index
    %28 = vector.load %arg10[%c0_24, %c0_25, %c0_26] : memref<1x8x32xbf16, #tpu.memory_space<vmem>>, vector<1x8x32xbf16>
    %29 = vector.shape_cast %28 : vector<1x8x32xbf16> to vector<8x32xbf16>
    %30 = vector.shape_cast %27 : vector<8x32xbf16> to vector<1x8x32xbf16>
    tpu.vector_store %arg10[%c0_24, %c0_25, %c0_26], %30 {strides = array<i32>} : memref<1x8x32xbf16, #tpu.memory_space<vmem>>, vector<1x8x32xbf16>,
    %31 = arith.truncf %22 : vector<8x32xf32> to vector<8x32xbf16>
    %c0_27 = arith.constant 0 : index
    %c0_28 = arith.constant 0 : index
    %c0_29 = arith.constant 0 : index
    %32 = vector.load %arg11[%c0_27, %c0_28, %c0_29] : memref<1x8x32xbf16, #tpu.memory_space<vmem>>, vector<1x8x32xbf16>
    %33 = vector.shape_cast %32 : vector<1x8x32xbf16> to vector<8x32xbf16>
    %34 = vector.shape_cast %31 : vector<8x32xbf16> to vector<1x8x32xbf16>
    tpu.vector_store %arg11[%c0_27, %c0_28, %c0_29], %34 {strides = array<i32>} : memref<1x8x32xbf16, #tpu.memory_space<vmem>>, vector<1x8x32xbf16>,
    return
  }
  func.func @transform_0(%arg0: i32, %arg1: i32) -> (i32, i32, i32) {
    %c0_i32 = arith.constant 0 : i32
    %c0_i32_0 = arith.constant 0 : i32
    return %arg0, %arg1, %c0_i32 : i32, i32, i32
  }
  func.func @transform_1(%arg0: i32, %arg1: i32) -> (i32, i32, i32) {
    %c0_i32 = arith.constant 0 : i32
    %c0_i32_0 = arith.constant 0 : i32
    return %arg0, %arg1, %c0_i32 : i32, i32, i32
  }
  func.func @transform_2(%arg0: i32, %arg1: i32) -> (i32, i32, i32) {
    %c0_i32 = arith.constant 0 : i32
    %c0_i32_0 = arith.constant 0 : i32
    return %arg0, %arg1, %c0_i32 : i32, i32, i32
  }
  func.func @transform_3(%arg0: i32, %arg1: i32) -> (i32, i32) {
    %c0_i32 = arith.constant 0 : i32
    %c0_i32_0 = arith.constant 0 : i32
    %c0_i32_1 = arith.constant 0 : i32
    return %c0_i32, %c0_i32_0 : i32, i32
  }
  func.func @transform_4(%arg0: i32, %arg1: i32) -> (i32, i32) {
    %c0_i32 = arith.constant 0 : i32
    %c0_i32_0 = arith.constant 0 : i32
    %c0_i32_1 = arith.constant 0 : i32
    return %c0_i32, %c0_i32_0 : i32, i32
  }
  func.func @transform_5(%arg0: i32, %arg1: i32) -> (i32, i32) {
    %c0_i32 = arith.constant 0 : i32
    %c0_i32_0 = arith.constant 0 : i32
    %c0_i32_1 = arith.constant 0 : i32
    return %c0_i32, %c0_i32_0 : i32, i32
  }
  func.func @transform_6(%arg0: i32, %arg1: i32) -> (i32, i32) {
    %c0_i32 = arith.constant 0 : i32
    %c0_i32_0 = arith.constant 0 : i32
    %c0_i32_1 = arith.constant 0 : i32
    return %c0_i32, %c0_i32_0 : i32, i32
  }
  func.func @transform_7(%arg0: i32, %arg1: i32) -> (i32, i32, i32) {
    %c0_i32 = arith.constant 0 : i32
    %c0_i32_0 = arith.constant 0 : i32
    return %arg0, %arg1, %c0_i32 : i32, i32, i32
  }
  func.func @transform_8(%arg0: i32, %arg1: i32) -> (i32, i32, i32) {
    %c0_i32 = arith.constant 0 : i32
    %c0_i32_0 = arith.constant 0 : i32
    return %arg0, %arg1, %c0_i32 : i32, i32, i32
  }
  func.func @transform_9(%arg0: i32, %arg1: i32) -> (i32, i32, i32) {
    %c0_i32 = arith.constant 0 : i32
    %c0_i32_0 = arith.constant 0 : i32
    return %arg0, %arg1, %c0_i32 : i32, i32, i32
  }
}

</mosaic_0001>

<llo_original>
// kernel: tpu_custom_call.1
$region0: #{tpu_custom_call.1}
  #allocation0 [shape = 'u32[]', space=smem, size = 0x4, offset = 0x4, fixed_abs, tag = 'smem constant byte address 0x4 - core index']
  #allocation1 [shape = 'u32[144,128]{1,0:T(1,128)}', space=vmem, size = 0x12000, scoped, tag = 'internal scratch']
  %s0 = inlined_call_operand.hbm [shape: bf16[2,8,32], index: 0, kind: input, shape index: {}]
  %s1 = inlined_call_operand.hbm [shape: bf16[2,8,32], index: 1, kind: input, shape index: {}]
  %s2 = inlined_call_operand.hbm [shape: bf16[2,8,32], index: 2, kind: input, shape index: {}]
  %s3 = inlined_call_operand.hbm [shape: bf16[32,32], index: 3, kind: input, shape index: {}]
  %s4 = inlined_call_operand.hbm [shape: bf16[32,32], index: 4, kind: input, shape index: {}]
  %s5 = inlined_call_operand.hbm [shape: bf16[32,32], index: 5, kind: input, shape index: {}]
  %s6 = inlined_call_operand.vmem [shape: f32[3,32], index: 6, kind: input, shape index: {}]
  %s7 = inlined_call_operand.hbm [shape: bf16[2,8,32], index: 7, kind: output, shape index: {0}]
  %s8 = inlined_call_operand.hbm [shape: bf16[2,8,32], index: 8, kind: output, shape index: {1}]
  %s9 = inlined_call_operand.hbm [shape: bf16[2,8,32], index: 9, kind: output, shape index: {2}]
  %10 = xla_tuple %s7, %s8, %s9
  %s11 = sld [smem:[#allocation0]]
  $region101: #{tpu_custom_call.1} parent=0
    _
  %s13 = ssub.s32 1, %s11
  %s14 = scalar_select 0, %s13, %s11
  $region1: #{tpu_custom_call.1} parent=0
    #allocation2 [shape = 'u8[4096]{0}', space=vmem, size = 0x1000, scoped, tag = 'input window, operand 0']
    #allocation3 [shape = 's32[2]{0}', space=sflag, size = 0x8, scoped, tag = 'scoped memory for tpu_custom_call.1']
    #allocation4 [shape = 's32[2]{0}', space=sflag, size = 0x8, scoped, tag = 'scoped memory for tpu_custom_call.1']
    #allocation5 [shape = 'u8[4096]{0}', space=vmem, size = 0x1000, scoped, tag = 'input window, operand 1']
    #allocation6 [shape = 's32[2]{0}', space=sflag, size = 0x8, scoped, tag = 'scoped memory for tpu_custom_call.1']
    #allocation7 [shape = 'u8[4096]{0}', space=vmem, size = 0x1000, scoped, tag = 'input window, operand 2']
    #allocation8 [shape = 'u8[8192]{0}', space=vmem, size = 0x2000, scoped, tag = 'input window, operand 3, single buffered']
    #allocation9 [shape = 's32[1]{0}', space=sflag, size = 0x4, scoped, tag = 'scoped memory for tpu_custom_call.1']
    #allocation10 [shape = 'u8[8192]{0}', space=vmem, size = 0x2000, scoped, tag = 'input window, operand 4, single buffered']
    #allocation11 [shape = 'u8[8192]{0}', space=vmem, size = 0x2000, scoped, tag = 'input window, operand 5, single buffered']
    #allocation12 [shape = 's32[1]{0}', space=sflag, size = 0x4, scoped, tag = 'scoped memory for tpu_custom_call.1']
    #allocation13 [shape = 'u8[4096]{0}', space=vmem, size = 0x1000, scoped, tag = 'output window, operand 0']
    #allocation14 [shape = 'u8[4096]{0}', space=vmem, size = 0x1000, scoped, tag = 'output window, operand 1']
    #allocation15 [shape = 's32[2]{0}', space=sflag, size = 0x8, scoped, tag = 'scoped memory for tpu_custom_call.1']
    #allocation16 [shape = 'u8[4096]{0}', space=vmem, size = 0x1000, scoped, tag = 'output window, operand 2']
    %15 = vsyncpa [#allocation3], 0
    %s16 = scalar_lea.sflag [#allocation3], 1
    %17 = vsyncpa %s16, 0
    %18 = vsyncpa [#allocation6], 0
    %s19 = scalar_lea.sflag [#allocation6], 1
    %20 = vsyncpa %s19, 0
    %21 = vsyncpa [#allocation9], 0
    %22 = vsyncpa [#allocation12], 0
    %23 = vsyncpa [#allocation4], 0
    %s24 = scalar_lea.sflag [#allocation4], 1
    %25 = vsyncpa %s24, 0
    %26 = vsyncpa [#allocation15], 0
    %s27 = scalar_lea.sflag [#allocation15], 1
    %28 = vsyncpa %s27, 0
    loop: start=0, step=1, limit=4
    $region2: #{tpu_custom_call.1} parent=1 // loop_pre_header
      _
    $region3: #{tpu_custom_call.1} parent=1 // loop_header
      %s30 = sphi 0, %s34
      %p31 = scmp.ge.s32.totalorder %s30, 4
      %s37 = sphi 0, %s49
      %s38 = sphi 0, %s45
      %s39 = sphi 0, %s37
      %s40 = sphi 0, %s38
      %s41 = sphi 0, %s39
      %s42 = sphi 0, %s40
      %s54 = sphi 0, %s56
      %s57 = sphi 0, %s54
      %s58 = sphi 0, %s57
      %s74 = sphi 0, %s58
      %s82 = sphi 0, %s84
      %s85 = sphi 0, %s82
      %s86 = sphi 0, %s85
      %s102 = sphi 0, %s86
      %s110 = sphi 0, %s112
      %s113 = sphi 0, %s110
      %s114 = sphi 0, %s113
      %s130 = sphi 0, %s114
      %s134 = sphi 0, %s134
      %s136 = sphi 0, %s134
      %s137 = sphi 0, %s136
      %s151 = sphi 0, %s137
      %s155 = sphi 0, %s155
      %s157 = sphi 0, %s155
      %s158 = sphi 0, %s157
      %s172 = sphi 0, %s158
      %s176 = sphi 0, %s176
      %s178 = sphi 0, %s176
      %s179 = sphi 0, %s178
      %s193 = sphi 0, %s179
      %s197 = sphi 0, %s197
      %s199 = sphi 0, %s197
      %s200 = sphi 0, %s199
      %s214 = sphi 0, %s200
      %s222 = sphi 0, %s224
      %s225 = sphi 0, %s222
      %s226 = sphi 0, %s225
      %s242 = sphi 0, %s226
      %s250 = sphi 0, %s252
      %s253 = sphi 0, %s250
      %s254 = sphi 0, %s253
      %s270 = sphi 0, %s254
      %s278 = sphi 0, %s280
      %s281 = sphi 0, %s278
      %s282 = sphi 0, %s281
      %s298 = sphi 0, %s282
    $region4: #{tpu_custom_call.1} parent=1 // loop_header_branch
      %33 = sbr.rel (%p31) target = $region8
    $region5: #{tpu_custom_call.1} parent=1 // loop_body
      %s35 = ssub.s32 %s30, 1
      %s36 = ssub.s32 %s30, 2
      %s43 = sadd.s32 1, %s38
      %p44 = scmp.ge.s32.totalorder %s43, 1
      %s45 = scalar_select %p44, 0, %s43
      %s46 = sadd.s32 1, %s37
      %s47 = scalar_select %p44, %s46, %s37
      %p48 = scmp.ge.s32.totalorder %s47, 2
      %s49 = scalar_select %p48, 0, %s47
      %s50 = ssub.s32 %s37, %s49
      %s51 = ssub.s32 %s38, %s45
      %s52 = sor.u32 %s50, %s51
      %p53 = scmp.eq.s32.totalorder %s52, 0
      %s55 = sadd.s32 %s54, 1
      %s56 = scalar_select %p53, %s54, %s55
      %p59 = pneg %p53
      %p60 = scmp.eq.s32.totalorder %s30, 1
      %p61 = por %p59, %p60
      %p62 = scmp.ne.s32.totalorder %s54, %s57
      %p63 = scmp.eq.s32.totalorder %s30, 0
      %p64 = por %p62, %p63
      %p65 = scmp.ne.s32.totalorder %s54, %s57
      %p66 = scmp.eq.s32.totalorder %s35, 1
      %p67 = por %p65, %p66
      %p68 = scmp.ne.s32.totalorder %s57, %s58
      %p69 = scmp.eq.s32.totalorder %s35, 0
      %p70 = por %p68, %p69
      %p71 = scmp.ne.s32.totalorder %s57, %s58
      %p72 = scmp.eq.s32.totalorder %s36, 1
      %p73 = por %p71, %p72
      %p75 = scmp.ne.s32.totalorder %s58, %s74
      %p76 = scmp.eq.s32.totalorder %s36, 0
      %p77 = por %p75, %p76
      %s78 = ssub.s32 %s37, %s49
      %s79 = ssub.s32 %s38, %s45
      %s80 = sor.u32 %s78, %s79
      %p81 = scmp.eq.s32.totalorder %s80, 0
      %s83 = sadd.s32 %s82, 1
      %s84 = scalar_select %p81, %s82, %s83
      %p87 = pneg %p81
      %p88 = scmp.eq.s32.totalorder %s30, 1
      %p89 = por %p87, %p88
      %p90 = scmp.ne.s32.totalorder %s82, %s85
      %p91 = scmp.eq.s32.totalorder %s30, 0
      %p92 = por %p90, %p91
      %p93 = scmp.ne.s32.totalorder %s82, %s85
      %p94 = scmp.eq.s32.totalorder %s35, 1
      %p95 = por %p93, %p94
      %p96 = scmp.ne.s32.totalorder %s85, %s86
      %p97 = scmp.eq.s32.totalorder %s35, 0
      %p98 = por %p96, %p97
      %p99 = scmp.ne.s32.totalorder %s85, %s86
      %p100 = scmp.eq.s32.totalorder %s36, 1
      %p101 = por %p99, %p100
      %p103 = scmp.ne.s32.totalorder %s86, %s102
      %p104 = scmp.eq.s32.totalorder %s36, 0
      %p105 = por %p103, %p104
      %s106 = ssub.s32 %s37, %s49
      %s107 = ssub.s32 %s38, %s45
      %s108 = sor.u32 %s106, %s107
      %p109 = scmp.eq.s32.totalorder %s108, 0
      %s111 = sadd.s32 %s110, 1
      %s112 = scalar_select %p109, %s110, %s111
      %p115 = pneg %p109
      %p116 = scmp.eq.s32.totalorder %s30, 1
      %p117 = por %p115, %p116
      %p118 = scmp.ne.s32.totalorder %s110, %s113
      %p119 = scmp.eq.s32.totalorder %s30, 0
      %p120 = por %p118, %p119
      %p121 = scmp.ne.s32.totalorder %s110, %s113
      %p122 = scmp.eq.s32.totalorder %s35, 1
      %p123 = por %p121, %p122
      %p124 = scmp.ne.s32.totalorder %s113, %s114
      %p125 = scmp.eq.s32.totalorder %s35, 0
      %p126 = por %p124, %p125
      %p127 = scmp.ne.s32.totalorder %s113, %s114
      %p128 = scmp.eq.s32.totalorder %s36, 1
      %p129 = por %p127, %p128
      %p131 = scmp.ne.s32.totalorder %s114, %s130
      %p132 = scmp.eq.s32.totalorder %s36, 0
      %p133 = por %p131, %p132
      %s135 = sadd.s32 %s134, 1
      %p138 = scmp.eq.s32.totalorder %s30, 1
      %p139 = scmp.ne.s32.totalorder %s134, %s136
      %p140 = scmp.eq.s32.totalorder %s30, 0
      %p141 = por %p139, %p140
      %p142 = scmp.ne.s32.totalorder %s134, %s136
      %p143 = scmp.eq.s32.totalorder %s35, 1
      %p144 = por %p142, %p143
      %p145 = scmp.ne.s32.totalorder %s136, %s137
      %p146 = scmp.eq.s32.totalorder %s35, 0
      %p147 = por %p145, %p146
      %p148 = scmp.ne.s32.totalorder %s136, %s137
      %p149 = scmp.eq.s32.totalorder %s36, 1
      %p150 = por %p148, %p149
      %p152 = scmp.ne.s32.totalorder %s137, %s151
      %p153 = scmp.eq.s32.totalorder %s36, 0
      %p154 = por %p152, %p153
      %s156 = sadd.s32 %s155, 1
      %p159 = scmp.eq.s32.totalorder %s30, 1
      %p160 = scmp.ne.s32.totalorder %s155, %s157
      %p161 = scmp.eq.s32.totalorder %s30, 0
      %p162 = por %p160, %p161
      %p163 = scmp.ne.s32.totalorder %s155, %s157
      %p164 = scmp.eq.s32.totalorder %s35, 1
      %p165 = por %p163, %p164
      %p166 = scmp.ne.s32.totalorder %s157, %s158
      %p167 = scmp.eq.s32.totalorder %s35, 0
      %p168 = por %p166, %p167
      %p169 = scmp.ne.s32.totalorder %s157, %s158
      %p170 = scmp.eq.s32.totalorder %s36, 1
      %p171 = por %p169, %p170
      %p173 = scmp.ne.s32.totalorder %s158, %s172
      %p174 = scmp.eq.s32.totalorder %s36, 0
      %p175 = por %p173, %p174
      %s177 = sadd.s32 %s176, 1
      %p180 = scmp.eq.s32.totalorder %s30, 1
      %p181 = scmp.ne.s32.totalorder %s176, %s178
      %p182 = scmp.eq.s32.totalorder %s30, 0
      %p183 = por %p181, %p182
      %p184 = scmp.ne.s32.totalorder %s176, %s178
      %p185 = scmp.eq.s32.totalorder %s35, 1
      %p186 = por %p184, %p185
      %p187 = scmp.ne.s32.totalorder %s178, %s179
      %p188 = scmp.eq.s32.totalorder %s35, 0
      %p189 = por %p187, %p188
      %p190 = scmp.ne.s32.totalorder %s178, %s179
      %p191 = scmp.eq.s32.totalorder %s36, 1
      %p192 = por %p190, %p191
      %p194 = scmp.ne.s32.totalorder %s179, %s193
      %p195 = scmp.eq.s32.totalorder %s36, 0
      %p196 = por %p194, %p195
      %s198 = sadd.s32 %s197, 1
      %p201 = scmp.eq.s32.totalorder %s30, 1
      %p202 = scmp.ne.s32.totalorder %s197, %s199
      %p203 = scmp.eq.s32.totalorder %s30, 0
      %p204 = por %p202, %p203
      %p205 = scmp.ne.s32.totalorder %s197, %s199
      %p206 = scmp.eq.s32.totalorder %s35, 1
      %p207 = por %p205, %p206
      %p208 = scmp.ne.s32.totalorder %s199, %s200
      %p209 = scmp.eq.s32.totalorder %s35, 0
      %p210 = por %p208, %p209
      %p211 = scmp.ne.s32.totalorder %s199, %s200
      %p212 = scmp.eq.s32.totalorder %s36, 1
      %p213 = por %p211, %p212
      %p215 = scmp.ne.s32.totalorder %s200, %s214
      %p216 = scmp.eq.s32.totalorder %s36, 0
      %p217 = por %p215, %p216
      %s218 = ssub.s32 %s37, %s49
      %s219 = ssub.s32 %s38, %s45
      %s220 = sor.u32 %s218, %s219
      %p221 = scmp.eq.s32.totalorder %s220, 0
      %s223 = sadd.s32 %s222, 1
      %s224 = scalar_select %p221, %s222, %s223
      %p227 = pneg %p221
      %p228 = scmp.eq.s32.totalorder %s30, 1
      %p229 = por %p227, %p228
      %p230 = scmp.ne.s32.totalorder %s222, %s225
      %p231 = scmp.eq.s32.totalorder %s30, 0
      %p232 = por %p230, %p231
      %p233 = scmp.ne.s32.totalorder %s222, %s225
      %p234 = scmp.eq.s32.totalorder %s35, 1
      %p235 = por %p233, %p234
      %p236 = scmp.ne.s32.totalorder %s225, %s226
      %p237 = scmp.eq.s32.totalorder %s35, 0
      %p238 = por %p236, %p237
      %p239 = scmp.ne.s32.totalorder %s225, %s226
      %p240 = scmp.eq.s32.totalorder %s36, 1
      %p241 = por %p239, %p240
      %p243 = scmp.ne.s32.totalorder %s226, %s242
      %p244 = scmp.eq.s32.totalorder %s36, 0
      %p245 = por %p243, %p244
      %s246 = ssub.s32 %s37, %s49
      %s247 = ssub.s32 %s38, %s45
      %s248 = sor.u32 %s246, %s247
      %p249 = scmp.eq.s32.totalorder %s248, 0
      %s251 = sadd.s32 %s250, 1
      %s252 = scalar_select %p249, %s250, %s251
      %p255 = pneg %p249
      %p256 = scmp.eq.s32.totalorder %s30, 1
      %p257 = por %p255, %p256
      %p258 = scmp.ne.s32.totalorder %s250, %s253
      %p259 = scmp.eq.s32.totalorder %s30, 0
      %p260 = por %p258, %p259
      %p261 = scmp.ne.s32.totalorder %s250, %s253
      %p262 = scmp.eq.s32.totalorder %s35, 1
      %p263 = por %p261, %p262
      %p264 = scmp.ne.s32.totalorder %s253, %s254
      %p265 = scmp.eq.s32.totalorder %s35, 0
      %p266 = por %p264, %p265
      %p267 = scmp.ne.s32.totalorder %s253, %s254
      %p268 = scmp.eq.s32.totalorder %s36, 1
      %p269 = por %p267, %p268
      %p271 = scmp.ne.s32.totalorder %s254, %s270
      %p272 = scmp.eq.s32.totalorder %s36, 0
      %p273 = por %p271, %p272
      %s274 = ssub.s32 %s37, %s49
      %s275 = ssub.s32 %s38, %s45
      %s276 = sor.u32 %s274, %s275
      %p277 = scmp.eq.s32.totalorder %s276, 0
      %s279 = sadd.s32 %s278, 1
      %s280 = scalar_select %p277, %s278, %s279
      %p283 = pneg %p277
      %p284 = scmp.eq.s32.totalorder %s30, 1
      %p285 = por %p283, %p284
      %p286 = scmp.ne.s32.totalorder %s278, %s281
      %p287 = scmp.eq.s32.totalorder %s30, 0
      %p288 = por %p286, %p287
      %p289 = scmp.ne.s32.totalorder %s278, %s281
      %p290 = scmp.eq.s32.totalorder %s35, 1
      %p291 = por %p289, %p290
      %p292 = scmp.ne.s32.totalorder %s281, %s282
      %p293 = scmp.eq.s32.totalorder %s35, 0
      %p294 = por %p292, %p293
      %p295 = scmp.ne.s32.totalorder %s281, %s282
      %p296 = scmp.eq.s32.totalorder %s36, 1
      %p297 = por %p295, %p296
      %p299 = scmp.ne.s32.totalorder %s282, %s298
      %p300 = scmp.eq.s32.totalorder %s36, 0
      %p301 = por %p299, %p300
      %p302 = scmp.le.s32.totalorder 1, %s30
      %p303 = scmp.lt.s32.totalorder %s30, 3
      %p304 = pnand %p302, %p303
      %p305 = pneg %p304
      // Predicated region
      $region9: #{tpu_custom_call.1} parent=5 // pred_check
        _
      $region10: #{tpu_custom_call.1} parent=5 // pred_check_branch
        %307 = sbr.rel (%p304) target = $region12
      $region11: #{tpu_custom_call.1} parent=5 // pred_region
        %s308 = ssub.s32 %s30, 1
        // Predicated region
        $region13: #{tpu_custom_call.1} parent=11 // pred_check
          %p309 = pneg %p147
        $region14: #{tpu_custom_call.1} parent=11 // pred_check_branch
          %311 = sbr.rel (%p309) target = $region16
        $region15: #{tpu_custom_call.1} parent=11 // pred_region
          %s313 = ssub.s32 256, 256
          %314 = vsyncadd [#allocation9], %s313
          %s315 = sshll.u32 [#allocation8], 4
          %s316 = int_to_ptr.vmem [resolvable:$true] %s315
          %321 = dma.hbm_to_vmem [thread:$0]  %s3, 256, %s316, [#allocation9], 64, 64, 4
        $region16: #{tpu_custom_call.1} parent=11 // pred_fallthru
          _
        // Predicated region
        $region17: #{tpu_custom_call.1} parent=11 // pred_check
          %p322 = pneg %p168
        $region18: #{tpu_custom_call.1} parent=11 // pred_check_branch
          %324 = sbr.rel (%p322) target = $region20
        $region19: #{tpu_custom_call.1} parent=11 // pred_region
          %s326 = ssub.s32 256, 256
          %327 = vsyncadd [#allocation9], %s326
          %s328 = sshll.u32 [#allocation10], 4
          %s329 = int_to_ptr.vmem [resolvable:$true] %s328
          %334 = dma.hbm_to_vmem [thread:$0]  %s4, 256, %s329, [#allocation9], 64, 64, 4
        $region20: #{tpu_custom_call.1} parent=11 // pred_fallthru
          _
        // Predicated region
        $region21: #{tpu_custom_call.1} parent=11 // pred_check
          %p335 = pneg %p189
        $region22: #{tpu_custom_call.1} parent=11 // pred_check_branch
          %337 = sbr.rel (%p335) target = $region24
        $region23: #{tpu_custom_call.1} parent=11 // pred_region
          %s339 = ssub.s32 256, 256
          %340 = vsyncadd [#allocation12], %s339
          %s341 = sshll.u32 [#allocation11], 4
          %s342 = int_to_ptr.vmem [resolvable:$true] %s341
          %347 = dma.hbm_to_vmem [thread:$0]  %s5, 256, %s342, [#allocation12], 64, 64, 4
        $region24: #{tpu_custom_call.1} parent=11 // pred_fallthru
          _
        // Predicated region
        $region25: #{tpu_custom_call.1} parent=11 // pred_check
          %p348 = pneg %p210
        $region26: #{tpu_custom_call.1} parent=11 // pred_check_branch
          %350 = sbr.rel (%p348) target = $region28
        $region27: #{tpu_custom_call.1} parent=11 // pred_region
          _
        $region28: #{tpu_custom_call.1} parent=11 // pred_fallthru
          _
      $region12: #{tpu_custom_call.1} parent=5 // pred_fallthru
        _
      %p351 = scmp.lt.s32.totalorder %s30, 2
      // Predicated region
      $region29: #{tpu_custom_call.1} parent=5 // pred_check
        %p352 = pneg %p351
      $region30: #{tpu_custom_call.1} parent=5 // pred_check_branch
        %354 = sbr.rel (%p352) target = $region32
      $region31: #{tpu_custom_call.1} parent=5 // pred_region
        // Predicated region
        $region33: #{tpu_custom_call.1} parent=31 // pred_check
          %p355 = pneg %p64
        $region34: #{tpu_custom_call.1} parent=31 // pred_check_branch
          %357 = sbr.rel (%p355) target = $region36
        $region35: #{tpu_custom_call.1} parent=31 // pred_region
          %s358 = sand.u32 %s54, 1
          %s359 = scalar_lea.sflag [#allocation3], %s358
          %s360 = sand.u32 %s54, 1
          %s361 = smul.addr %s360, 4
          %s362 = scalar_lea.vmem [#allocation2], %s361
          %s364 = ssub.s32 64, 64
          %365 = vsyncadd %s359, %s364
          %s366 = sadd.s32 %s38, %s37
          %s367 = smul.addr %s366, 64
          %s368 = scalar_lea.hbm %s0, %s367
          %s370 = sshll.u32 %s362, 4
          %s371 = int_to_ptr.vmem [resolvable:$true] %s370
          %373 = dma.hbm_to_vmem [thread:$0]  %s368, 64, %s371, %s359
        $region36: #{tpu_custom_call.1} parent=31 // pred_fallthru
          _
        // Predicated region
        $region37: #{tpu_custom_call.1} parent=31 // pred_check
          %p374 = pneg %p92
        $region38: #{tpu_custom_call.1} parent=31 // pred_check_branch
          %376 = sbr.rel (%p374) target = $region40
        $region39: #{tpu_custom_call.1} parent=31 // pred_region
          %s377 = sand.u32 %s30, 1
          %s378 = scalar_lea.sflag [#allocation6], %s377
          %s379 = sand.u32 %s82, 1
          %s380 = smul.addr %s379, 4
          %s381 = scalar_lea.vmem [#allocation5], %s380
          %s383 = ssub.s32 64, 64
          %384 = vsyncadd %s378, %s383
          %s385 = sadd.s32 %s38, %s37
          %s386 = smul.addr %s385, 64
          %s387 = scalar_lea.hbm %s1, %s386
          %s389 = sshll.u32 %s381, 4
          %s390 = int_to_ptr.vmem [resolvable:$true] %s389
          %392 = dma.hbm_to_vmem [thread:$0]  %s387, 64, %s390, %s378
        $region40: #{tpu_custom_call.1} parent=31 // pred_fallthru
          _
        // Predicated region
        $region41: #{tpu_custom_call.1} parent=31 // pred_check
          %p393 = pneg %p120
        $region42: #{tpu_custom_call.1} parent=31 // pred_check_branch
          %395 = sbr.rel (%p393) target = $region44
        $region43: #{tpu_custom_call.1} parent=31 // pred_region
          %s396 = sand.u32 %s30, 1
          %s397 = scalar_lea.sflag [#allocation6], %s396
          %s398 = sand.u32 %s110, 1
          %s399 = smul.addr %s398, 4
          %s400 = scalar_lea.vmem [#allocation7], %s399
          %s402 = ssub.s32 64, 64
          %403 = vsyncadd %s397, %s402
          %s404 = sadd.s32 %s38, %s37
          %s405 = smul.addr %s404, 64
          %s406 = scalar_lea.hbm %s2, %s405
          %s408 = sshll.u32 %s400, 4
          %s409 = int_to_ptr.vmem [resolvable:$true] %s408
          %411 = dma.hbm_to_vmem [thread:$0]  %s406, 64, %s409, %s397
        $region44: #{tpu_custom_call.1} parent=31 // pred_fallthru
          _
      $region32: #{tpu_custom_call.1} parent=5 // pred_fallthru
        _
      %p412 = scmp.le.s32.totalorder 1, %s30
      %p413 = scmp.lt.s32.totalorder %s30, 3
      %p414 = pnand %p412, %p413
      %p415 = pneg %p414
      // Predicated region
      $region45: #{tpu_custom_call.1} parent=5 // pred_check
        _
      $region46: #{tpu_custom_call.1} parent=5 // pred_check_branch
        %417 = sbr.rel (%p414) target = $region48
      $region47: #{tpu_custom_call.1} parent=5 // pred_region
        %s418 = ssub.s32 %s30, 1
        %s419 = sand.u32 %s57, 1
        %s420 = scalar_lea.sflag [#allocation3], %s419
        %s421 = sand.u32 %s57, 1
        %s422 = smul.addr %s421, 4
        %s423 = scalar_lea.vmem [#allocation2], %s422
        // Predicated region
        $region49: #{tpu_custom_call.1} parent=47 // pred_check
          %p424 = pneg %p70
        $region50: #{tpu_custom_call.1} parent=47 // pred_check_branch
          %426 = sbr.rel (%p424) target = $region52
        $region51: #{tpu_custom_call.1} parent=47 // pred_region
          %427 = dma.done %s420, 64
        $region52: #{tpu_custom_call.1} parent=47 // pred_fallthru
          _
        %s428 = sand.u32 %s35, 1
        %s429 = scalar_lea.sflag [#allocation6], %s428
        %s430 = sand.u32 %s85, 1
        %s431 = smul.addr %s430, 4
        %s432 = scalar_lea.vmem [#allocation5], %s431
        // Predicated region
        $region53: #{tpu_custom_call.1} parent=47 // pred_check
          %p433 = pneg %p98
        $region54: #{tpu_custom_call.1} parent=47 // pred_check_branch
          %435 = sbr.rel (%p433) target = $region56
        $region55: #{tpu_custom_call.1} parent=47 // pred_region
          %436 = dma.done %s429, 64
        $region56: #{tpu_custom_call.1} parent=47 // pred_fallthru
          _
        %s437 = sand.u32 %s35, 1
        %s438 = scalar_lea.sflag [#allocation6], %s437
        %s439 = sand.u32 %s113, 1
        %s440 = smul.addr %s439, 4
        %s441 = scalar_lea.vmem [#allocation7], %s440
        // Predicated region
        $region57: #{tpu_custom_call.1} parent=47 // pred_check
          %p442 = pneg %p126
        $region58: #{tpu_custom_call.1} parent=47 // pred_check_branch
          %444 = sbr.rel (%p442) target = $region60
        $region59: #{tpu_custom_call.1} parent=47 // pred_region
          %445 = dma.done %s438, 64
        $region60: #{tpu_custom_call.1} parent=47 // pred_fallthru
          _
        // Predicated region
        $region61: #{tpu_custom_call.1} parent=47 // pred_check
          %p446 = pneg %p147
        $region62: #{tpu_custom_call.1} parent=47 // pred_check_branch
          %448 = sbr.rel (%p446) target = $region64
        $region63: #{tpu_custom_call.1} parent=47 // pred_region
          %449 = dma.done [#allocation9], 256
        $region64: #{tpu_custom_call.1} parent=47 // pred_fallthru
          _
        // Predicated region
        $region65: #{tpu_custom_call.1} parent=47 // pred_check
          %p450 = pneg %p168
        $region66: #{tpu_custom_call.1} parent=47 // pred_check_branch
          %452 = sbr.rel (%p450) target = $region68
        $region67: #{tpu_custom_call.1} parent=47 // pred_region
          %453 = dma.done [#allocation9], 256
        $region68: #{tpu_custom_call.1} parent=47 // pred_fallthru
          _
        // Predicated region
        $region69: #{tpu_custom_call.1} parent=47 // pred_check
          %p454 = pneg %p189
        $region70: #{tpu_custom_call.1} parent=47 // pred_check_branch
          %456 = sbr.rel (%p454) target = $region72
        $region71: #{tpu_custom_call.1} parent=47 // pred_region
          %457 = dma.done [#allocation12], 256
        $region72: #{tpu_custom_call.1} parent=47 // pred_fallthru
          _
        %s458 = sand.u32 %s57, 1
        %s459 = scalar_lea.sflag [#allocation3], %s458
        %s460 = sand.u32 %s57, 1
        %s461 = smul.addr %s460, 4
        %s462 = scalar_lea.vmem [#allocation2], %s461
        %p463 = pneg %p70
        %p464 = pneg %p67
        %s465 = sand.u32 %s35, 1
        %s466 = scalar_lea.sflag [#allocation6], %s465
        %s467 = sand.u32 %s85, 1
        %s468 = smul.addr %s467, 4
        %s469 = scalar_lea.vmem [#allocation5], %s468
        %p470 = pneg %p98
        %p471 = pneg %p95
        %s472 = sand.u32 %s35, 1
        %s473 = scalar_lea.sflag [#allocation6], %s472
        %s474 = sand.u32 %s113, 1
        %s475 = smul.addr %s474, 4
        %s476 = scalar_lea.vmem [#allocation7], %s475
        %p477 = pneg %p126
        %p478 = pneg %p123
        %p479 = pneg %p147
        %p480 = pneg %p144
        %p481 = pneg %p168
        %p482 = pneg %p165
        %p483 = pneg %p189
        %p484 = pneg %p186
        %p485 = pneg %p210
        %p486 = pneg %p207
        %p487 = pneg %p238
        %p488 = pneg %p235
        %s489 = sand.u32 %s225, 1
        %s490 = scalar_lea.sflag [#allocation4], %s489
        %s491 = sand.u32 %s225, 1
        %s492 = smul.addr %s491, 4
        %s493 = scalar_lea.vmem [#allocation13], %s492
        %p494 = pneg %p266
        %p495 = pneg %p263
        %s496 = sand.u32 %s35, 1
        %s497 = scalar_lea.sflag [#allocation15], %s496
        %s498 = sand.u32 %s253, 1
        %s499 = smul.addr %s498, 4
        %s500 = scalar_lea.vmem [#allocation14], %s499
        %p501 = pneg %p294
        %p502 = pneg %p291
        %s503 = sand.u32 %s35, 1
        %s504 = scalar_lea.sflag [#allocation15], %s503
        %s505 = sand.u32 %s281, 1
        %s506 = smul.addr %s505, 4
        %s507 = scalar_lea.vmem [#allocation16], %s506
        %v509 = vld [vmem:[%s423] sm:$0xf]
        %v510 = vld [vmem:[#allocation8] sm:$0xf]
        %v511 = vld [vmem:[#allocation8 + $0x4] sm:$0xf]
        %v512 = vld [vmem:[#allocation8 + $0x8] sm:$0xf]
        %v513 = vld [vmem:[#allocation8 + $0xc] sm:$0xf]
        %v514 = vld [vmem:[%s6] sm:$0x1]
        %v515 = vlaneseq
        %v516 = vshrl.u32 %v515, 7
        %v517 = vsub.s32 0, %v516
        %v518 = vrot.slane %v514, %v517
        %v523 = vunpack.c.l.b16 %v510
        %v524 = vunpack.c.l.b16 %v511
        %v525 = vunpack.c.l.b16 %v512
        %v526 = vunpack.c.l.b16 %v513
        %v527 = vpack.c.b16 %v524, %v523
        %v528 = vpack.c.b16 %v526, %v525
        %vm531 = vcmask 261120
        %v533 = vsel %vm531, %v509, 0
        %535 = vmatprep.subr.bf16.mxu0 0
        %536 = vmatpush1.bf16.msra.mxu0 0
        %537 = vmatprep.subr.bf16.mxu0 0
        %538 = vmatpush1.bf16.msra.mxu0 0
        %539 = vmatprep.subr.bf16.mxu0 0
        %540 = vmatpush1.bf16.msra.mxu0 0
        %541 = vmatprep.subr.bf16.mxu0 0
        %542 = vmatpush1.bf16.msra.mxu0 0
        %543 = vmatprep.subr.bf16.mxu0 0
        %544 = vmatpush1.bf16.msra.mxu0 0
        %545 = vmatprep.subr.bf16.mxu0 0
        %546 = vmatpush1.bf16.msra.mxu0 0
        %547 = vmatprep.subr.bf16.mxu0 0
        %548 = vmatpush1.bf16.msra.mxu0 %v528
        %549 = vmatprep.subr.bf16.mxu0 0
        %550 = vmatpush1.bf16.msra.mxu0 %v527
        %551 = vmatprep.subr.bf16.mxu0 0
        %552 = vmatpush2.bf16.msra.mxu0 0
        %553 = vmatprep.subr.bf16.mxu0 0
        %554 = vmatpush2.bf16.msra.mxu0 0
        %555 = vmatprep.subr.bf16.mxu0 0
        %556 = vmatpush2.bf16.msra.mxu0 0
        %557 = vmatprep.subr.bf16.mxu0 0
        %558 = vmatpush2.bf16.msra.mxu0 0
        %559 = vmatprep.subr.bf16.mxu0 0
        %560 = vmatpush2.bf16.msra.mxu0 0
        %561 = vmatprep.subr.bf16.mxu0 0
        %562 = vmatpush2.bf16.msra.mxu0 0
        %563 = vmatprep.subr.bf16.mxu0 0
        %564 = vmatpush2.bf16.msra.mxu0 0
        %565 = vmatprep.subr.bf16.mxu0 0
        %566 = vmatpush2.bf16.msra.mxu0 0
        %567 = vmatprep.mubr.bf16.mxu0 0
        %568 = vmatmul.mubr.bf16.gmra.mxu0 %v533
        %v569 = vpop.f32.mrf.mxu0
        %v570 = vadd.f32 %v518, %v569
        %v571 = vpop.f32.mrf.mxu0
        %v572 = vpop.f32.mrf.mxu0
        %v573 = vpop.f32.mrf.mxu0
        %574 = vdwg.mxu0
        %v575 = vld [vmem:[%s432] sm:$0xf]
        %v576 = vld [vmem:[#allocation10] sm:$0xf]
        %v577 = vld [vmem:[#allocation10 + $0x4] sm:$0xf]
        %v578 = vld [vmem:[#allocation10 + $0x8] sm:$0xf]
        %v579 = vld [vmem:[#allocation10 + $0xc] sm:$0xf]
        %v580 = vld [vmem:[%s6 + $0x1] sm:$0x1]
        %v581 = vlaneseq
        %v582 = vshrl.u32 %v581, 7
        %v583 = vsub.s32 0, %v582
        %v584 = vrot.slane %v580, %v583
        %v589 = vunpack.c.l.b16 %v576
        %v590 = vunpack.c.l.b16 %v577
        %v591 = vunpack.c.l.b16 %v578
        %v592 = vunpack.c.l.b16 %v579
        %v593 = vpack.c.b16 %v590, %v589
        %v594 = vpack.c.b16 %v592, %v591
        %v598 = vsel %vm531, %v575, 0
        %600 = vmatprep.subr.bf16.mxu0 0
        %601 = vmatpush1.bf16.msra.mxu0 0
        %602 = vmatprep.subr.bf16.mxu0 0
        %603 = vmatpush1.bf16.msra.mxu0 0
        %604 = vmatprep.subr.bf16.mxu0 0
        %605 = vmatpush1.bf16.msra.mxu0 0
        %606 = vmatprep.subr.bf16.mxu0 0
        %607 = vmatpush1.bf16.msra.mxu0 0
        %608 = vmatprep.subr.bf16.mxu0 0
        %609 = vmatpush1.bf16.msra.mxu0 0
        %610 = vmatprep.subr.bf16.mxu0 0
        %611 = vmatpush1.bf16.msra.mxu0 0
        %612 = vmatprep.subr.bf16.mxu0 0
        %613 = vmatpush1.bf16.msra.mxu0 %v594
        %614 = vmatprep.subr.bf16.mxu0 0
        %615 = vmatpush1.bf16.msra.mxu0 %v593
        %616 = vmatprep.subr.bf16.mxu0 0
        %617 = vmatpush2.bf16.msra.mxu0 0
        %618 = vmatprep.subr.bf16.mxu0 0
        %619 = vmatpush2.bf16.msra.mxu0 0
        %620 = vmatprep.subr.bf16.mxu0 0
        %621 = vmatpush2.bf16.msra.mxu0 0
        %622 = vmatprep.subr.bf16.mxu0 0
        %623 = vmatpush2.bf16.msra.mxu0 0
        %624 = vmatprep.subr.bf16.mxu0 0
        %625 = vmatpush2.bf16.msra.mxu0 0
        %626 = vmatprep.subr.bf16.mxu0 0
        %627 = vmatpush2.bf16.msra.mxu0 0
        %628 = vmatprep.subr.bf16.mxu0 0
        %629 = vmatpush2.bf16.msra.mxu0 0
        %630 = vmatprep.subr.bf16.mxu0 0
        %631 = vmatpush2.bf16.msra.mxu0 0
        %632 = vmatprep.mubr.bf16.mxu0 0
        %633 = vmatmul.mubr.bf16.gmra.mxu0 %v598
        %v634 = vpop.f32.mrf.mxu0
        %v635 = vadd.f32 %v584, %v634
        %v636 = vpop.f32.mrf.mxu0
        %v637 = vpop.f32.mrf.mxu0
        %v638 = vpop.f32.mrf.mxu0
        %639 = vdwg.mxu0
        %v640 = vld [vmem:[%s441] sm:$0xf]
        %v641 = vld [vmem:[#allocation11] sm:$0xf]
        %v642 = vld [vmem:[#allocation11 + $0x4] sm:$0xf]
        %v643 = vld [vmem:[#allocation11 + $0x8] sm:$0xf]
        %v644 = vld [vmem:[#allocation11 + $0xc] sm:$0xf]
        %v645 = vld [vmem:[%s6 + $0x2] sm:$0x1]
        %v646 = vlaneseq
        %v647 = vshrl.u32 %v646, 7
        %v648 = vsub.s32 0, %v647
        %v649 = vrot.slane %v645, %v648
        %v654 = vunpack.c.l.b16 %v641
        %v655 = vunpack.c.l.b16 %v642
        %v656 = vunpack.c.l.b16 %v643
        %v657 = vunpack.c.l.b16 %v644
        %v658 = vpack.c.b16 %v655, %v654
        %v659 = vpack.c.b16 %v657, %v656
        %v663 = vsel %vm531, %v640, 0
        %665 = vmatprep.subr.bf16.mxu0 0
        %666 = vmatpush1.bf16.msra.mxu0 0
        %667 = vmatprep.subr.bf16.mxu0 0
        %668 = vmatpush1.bf16.msra.mxu0 0
        %669 = vmatprep.subr.bf16.mxu0 0
        %670 = vmatpush1.bf16.msra.mxu0 0
        %671 = vmatprep.subr.bf16.mxu0 0
        %672 = vmatpush1.bf16.msra.mxu0 0
        %673 = vmatprep.subr.bf16.mxu0 0
        %674 = vmatpush1.bf16.msra.mxu0 0
        %675 = vmatprep.subr.bf16.mxu0 0
        %676 = vmatpush1.bf16.msra.mxu0 0
        %677 = vmatprep.subr.bf16.mxu0 0
        %678 = vmatpush1.bf16.msra.mxu0 %v659
        %679 = vmatprep.subr.bf16.mxu0 0
        %680 = vmatpush1.bf16.msra.mxu0 %v658
        %681 = vmatprep.subr.bf16.mxu0 0
        %682 = vmatpush2.bf16.msra.mxu0 0
        %683 = vmatprep.subr.bf16.mxu0 0
        %684 = vmatpush2.bf16.msra.mxu0 0
        %685 = vmatprep.subr.bf16.mxu0 0
        %686 = vmatpush2.bf16.msra.mxu0 0
        %687 = vmatprep.subr.bf16.mxu0 0
        %688 = vmatpush2.bf16.msra.mxu0 0
        %689 = vmatprep.subr.bf16.mxu0 0
        %690 = vmatpush2.bf16.msra.mxu0 0
        %691 = vmatprep.subr.bf16.mxu0 0
        %692 = vmatpush2.bf16.msra.mxu0 0
        %693 = vmatprep.subr.bf16.mxu0 0
        %694 = vmatpush2.bf16.msra.mxu0 0
        %695 = vmatprep.subr.bf16.mxu0 0
        %696 = vmatpush2.bf16.msra.mxu0 0
        %697 = vmatprep.mubr.bf16.mxu0 0
        %698 = vmatmul.mubr.bf16.gmra.mxu0 %v663
        %v699 = vpop.f32.mrf.mxu0
        %v700 = vadd.f32 %v649, %v699
        %v701 = vpop.f32.mrf.mxu0
        %v702 = vpop.f32.mrf.mxu0
        %v703 = vpop.f32.mrf.mxu0
        %704 = vdwg.mxu0
        %v705 = vmul.f32 %v700, 0.35355338
        %v706 = vpack.c.bf16 %v570, %v570
        %vm707 = vcmask 257024
        %708 = vst.msk [vmem:[%s493] sm:$0xf] %vm707, %v706
        %v709 = vpack.c.bf16 %v635, %v635
        %710 = vst.msk [vmem:[%s500] sm:$0xf] %vm707, %v709
        %v711 = vpack.c.bf16 %v705, %v705
        %712 = vst.msk [vmem:[%s507] sm:$0xf] %vm707, %v711
        %s713 = sand.u32 %s225, 1
        %s714 = scalar_lea.sflag [#allocation4], %s713
        %s715 = sand.u32 %s225, 1
        %s716 = smul.addr %s715, 4
        %s717 = scalar_lea.vmem [#allocation13], %s716
        %s718 = sand.u32 %s35, 1
        %s719 = scalar_lea.sflag [#allocation15], %s718
        %s720 = sand.u32 %s253, 1
        %s721 = smul.addr %s720, 4
        %s722 = scalar_lea.vmem [#allocation14], %s721
        %s723 = sand.u32 %s35, 1
        %s724 = scalar_lea.sflag [#allocation15], %s723
        %s725 = sand.u32 %s281, 1
        %s726 = smul.addr %s725, 4
        %s727 = scalar_lea.vmem [#allocation16], %s726
        // Predicated region
        $region73: #{tpu_custom_call.1} parent=47 // pred_check
          %p728 = pneg %p235
        $region74: #{tpu_custom_call.1} parent=47 // pred_check_branch
          %730 = sbr.rel (%p728) target = $region76
        $region75: #{tpu_custom_call.1} parent=47 // pred_region
          %s732 = ssub.s32 64, 64
          %733 = vsyncadd %s714, %s732
          %s734 = sadd.s32 %s40, %s39
          %s735 = smul.addr %s734, 64
          %s736 = scalar_lea.hbm %s7, %s735
          %s738 = sshll.u32 %s717, 4
          %s739 = int_to_ptr.vmem [resolvable:$true] %s738
          %741 = dma.vmem_to_hbm [thread:$0]  %s739, 64, %s736, %s714
        $region76: #{tpu_custom_call.1} parent=47 // pred_fallthru
          _
        // Predicated region
        $region77: #{tpu_custom_call.1} parent=47 // pred_check
          %p742 = pneg %p263
        $region78: #{tpu_custom_call.1} parent=47 // pred_check_branch
          %744 = sbr.rel (%p742) target = $region80
        $region79: #{tpu_custom_call.1} parent=47 // pred_region
          %s746 = ssub.s32 64, 64
          %747 = vsyncadd %s719, %s746
          %s748 = sadd.s32 %s40, %s39
          %s749 = smul.addr %s748, 64
          %s750 = scalar_lea.hbm %s8, %s749
          %s752 = sshll.u32 %s722, 4
          %s753 = int_to_ptr.vmem [resolvable:$true] %s752
          %755 = dma.vmem_to_hbm [thread:$0]  %s753, 64, %s750, %s719
        $region80: #{tpu_custom_call.1} parent=47 // pred_fallthru
          _
        // Predicated region
        $region81: #{tpu_custom_call.1} parent=47 // pred_check
          %p756 = pneg %p291
        $region82: #{tpu_custom_call.1} parent=47 // pred_check_branch
          %758 = sbr.rel (%p756) target = $region84
        $region83: #{tpu_custom_call.1} parent=47 // pred_region
          %s760 = ssub.s32 64, 64
          %761 = vsyncadd %s724, %s760
          %s762 = sadd.s32 %s40, %s39
          %s763 = smul.addr %s762, 64
          %s764 = scalar_lea.hbm %s9, %s763
          %s766 = sshll.u32 %s727, 4
          %s767 = int_to_ptr.vmem [resolvable:$true] %s766
          %769 = dma.vmem_to_hbm [thread:$0]  %s767, 64, %s764, %s724
        $region84: #{tpu_custom_call.1} parent=47 // pred_fallthru
          _
      $region48: #{tpu_custom_call.1} parent=5 // pred_fallthru
        _
      %p770 = scmp.le.s32.totalorder 2, %s30
      // Predicated region
      $region85: #{tpu_custom_call.1} parent=5 // pred_check
        %p771 = pneg %p770
      $region86: #{tpu_custom_call.1} parent=5 // pred_check_branch
        %773 = sbr.rel (%p771) target = $region88
      $region87: #{tpu_custom_call.1} parent=5 // pred_region
        %s774 = ssub.s32 %s30, 2
        // Predicated region
        $region89: #{tpu_custom_call.1} parent=87 // pred_check
          %p775 = pneg %p241
        $region90: #{tpu_custom_call.1} parent=87 // pred_check_branch
          %777 = sbr.rel (%p775) target = $region92
        $region91: #{tpu_custom_call.1} parent=87 // pred_region
          %s778 = sand.u32 %s226, 1
          %s779 = scalar_lea.sflag [#allocation4], %s778
          %s780 = sand.u32 %s226, 1
          %s781 = smul.addr %s780, 4
          %s782 = scalar_lea.vmem [#allocation13], %s781
          %783 = dma.done %s779, 64
        $region92: #{tpu_custom_call.1} parent=87 // pred_fallthru
          _
        // Predicated region
        $region93: #{tpu_custom_call.1} parent=87 // pred_check
          %p784 = pneg %p269
        $region94: #{tpu_custom_call.1} parent=87 // pred_check_branch
          %786 = sbr.rel (%p784) target = $region96
        $region95: #{tpu_custom_call.1} parent=87 // pred_region
          %s787 = sand.u32 %s36, 1
          %s788 = scalar_lea.sflag [#allocation15], %s787
          %s789 = sand.u32 %s254, 1
          %s790 = smul.addr %s789, 4
          %s791 = scalar_lea.vmem [#allocation14], %s790
          %792 = dma.done %s788, 64
        $region96: #{tpu_custom_call.1} parent=87 // pred_fallthru
          _
        // Predicated region
        $region97: #{tpu_custom_call.1} parent=87 // pred_check
          %p793 = pneg %p297
        $region98: #{tpu_custom_call.1} parent=87 // pred_check_branch
          %795 = sbr.rel (%p793) target = $region100
        $region99: #{tpu_custom_call.1} parent=87 // pred_region
          %s796 = sand.u32 %s36, 1
          %s797 = scalar_lea.sflag [#allocation15], %s796
          %s798 = sand.u32 %s282, 1
          %s799 = smul.addr %s798, 4
          %s800 = scalar_lea.vmem [#allocation16], %s799
          %801 = dma.done %s797, 64
        $region100: #{tpu_custom_call.1} parent=87 // pred_fallthru
          _
      $region88: #{tpu_custom_call.1} parent=5 // pred_fallthru
        _
    $region6: #{tpu_custom_call.1} parent=1 // loop_footer
      %s34 = sadd.s32 1, %s30
    $region7: #{tpu_custom_call.1} parent=1 // loop_footer_branch
      %29 = sbr.rel target = $region3
    $region8: #{tpu_custom_call.1} parent=1 // loop_exit
      _
    %802 = vsyncpa [#allocation3], 1
    %s803 = scalar_lea.sflag [#allocation3], 1
    %804 = vsyncpa %s803, 1
    %805 = vsyncpa [#allocation6], 1
    %s806 = scalar_lea.sflag [#allocation6], 1
    %807 = vsyncpa %s806, 1
    %808 = vsyncpa [#allocation9], 1
    %809 = vsyncpa [#allocation12], 1
    %810 = vsyncpa [#allocation4], 1
    %s811 = scalar_lea.sflag [#allocation4], 1
    %812 = vsyncpa %s811, 1
    %813 = vsyncpa [#allocation15], 1
    %s814 = scalar_lea.sflag [#allocation15], 1
    %815 = vsyncpa %s814, 1

</llo_original>
